<compile_context>
chip_gen: v5e
topology: v5e:2x2
jax: 0.10.0
libtpu: 0.0.40
codegen_flags: <defaults>
</compile_context>

<pallas_src>
import functools

import jax
import jax.numpy as jnp
from jax import lax
from jax.experimental import pallas as pl
from jax.experimental.pallas import tpu as pltpu

NC = 1          # input feature dim (scalar input)
HIDDEN = 32     # hidden width
NEG_SLOPE = 0.2


def _leaky_relu(v):
    # For slope < 1, max(v, slope*v) == LeakyReLU(slope); single VALU op.
    return jnp.maximum(v, NEG_SLOPE * v)


def _mlp_kernel(x_ref, wh_ref, sp_ref, o_ref, *, chunk, num_chunks):
    """x_ref/o_ref: (1, tile) with batch on lanes.
    wh_ref: (3, 32, 32) hidden weights stored (out, in), f32 or bf16 (pre-cast).
    sp_ref: (32, 8) f32 rank-1 param slab; cols = [w1, w5, b1, b2, b3, b4, b5, pad].
    """
    w2 = wh_ref[0]
    w3 = wh_ref[1]
    w4 = wh_ref[2]
    mm_dt = w2.dtype

    # Rank-1 params, broadcast to chunk width ONCE (hoisted out of chunk loop).
    w1 = jnp.broadcast_to(sp_ref[:, 0:1], (HIDDEN, chunk))
    w5 = jnp.broadcast_to(sp_ref[:, 1:2], (HIDDEN, chunk))
    b1 = jnp.broadcast_to(sp_ref[:, 2:3], (HIDDEN, chunk))
    b2 = jnp.broadcast_to(sp_ref[:, 3:4], (HIDDEN, chunk))
    b3 = jnp.broadcast_to(sp_ref[:, 4:5], (HIDDEN, chunk))
    b4 = jnp.broadcast_to(sp_ref[:, 5:6], (HIDDEN, chunk))
    b5 = jnp.broadcast_to(sp_ref[0:1, 6:7], (1, chunk))

    def body(c, carry):
        off = pl.multiple_of(c * chunk, 128)
        x = x_ref[:, pl.ds(off, chunk)]                       # (1, chunk) f32

        # Layer 1 (in_features = 1): VPU broadcast FMA (no MXU).
        h = _leaky_relu(w1 * x + b1)                          # (32, chunk) f32

        # Layers 2-4: MXU  W[out,in] @ h[in,chunk]; bf16 operands, f32 accum.
        z = jnp.dot(w2, h.astype(mm_dt), preferred_element_type=jnp.float32)
        h = _leaky_relu(z + b2)
        z = jnp.dot(w3, h.astype(mm_dt), preferred_element_type=jnp.float32)
        h = _leaky_relu(z + b3)
        z = jnp.dot(w4, h.astype(mm_dt), preferred_element_type=jnp.float32)
        h = _leaky_relu(z + b4)

        # Layer 5 (out_features = 1): multiply + sublane reduce -> (1, chunk).
        out = jnp.sum(w5 * h, axis=0, keepdims=True) + b5
        o_ref[:, pl.ds(off, chunk)] = _leaky_relu(out).astype(o_ref.dtype)
        return carry

    lax.fori_loop(0, num_chunks, body, 0, unroll=True)


def _round_up(n, m):
    return ((n + m - 1) // m) * m


def _choose_tiling(B, batch_tile):
    b128 = _round_up(B, 128)                                   # lane-padded batch
    tile = max(128, min(_round_up(int(batch_tile), 128), b128))
    # v7x has 2 TensorCores: keep >= 2 parallel grid steps when batch allows.
    if (b128 // tile) < 2 and b128 >= 256:
        tile = _round_up(b128 // 2, 128)
    # Inner chunk: <= 512 lanes keeps ~32-48 live vregs (no spills); must divide
    # the tile (tile is always a multiple of 128, so this terminates at 128).
    chunk = 512
    while tile % chunk:
        chunk //= 2
    return tile, chunk


def discriminator_forward(x, params, *, batch_tile=4096, use_bf16_matmul=True):
    """x: (B, 1) float32. params: list of (W, b) with W=(in,out), b=(1,out)."""
    B, F = x.shape
    assert F == NC

    tile, chunk = _choose_tiling(B, batch_tile)
    Bp = _round_up(B, tile)
    grid = (Bp // tile,)
    num_chunks = tile // chunk

    # Layout plumbing only: batch -> lanes, zero-pad to Bp.
    xt = jnp.pad(x.astype(jnp.float32).T, ((0, 0), (0, Bp - B)))       # (1, Bp)

    (w1, b1), (w2, b2), (w3, b3), (w4, b4), (w5, b5) = params
    mm_dt = jnp.bfloat16 if use_bf16_matmul else jnp.float32
    # Hidden-layer weights, stored (out, in), pre-cast host-side (no per-step cast).
    wh = jnp.stack([w2.T, w3.T, w4.T]).astype(mm_dt)                   # (3, 32, 32)
    # Single small f32 slab for every rank-1 parameter (one DMA instead of two).
    sp = jnp.stack([
        w1.reshape(HIDDEN), w5.reshape(HIDDEN),
        b1.reshape(HIDDEN), b2.reshape(HIDDEN),
        b3.reshape(HIDDEN), b4.reshape(HIDDEN),
        jnp.full((HIDDEN,), b5.reshape(-1)[0], jnp.float32),
        jnp.zeros((HIDDEN,), jnp.float32),
    ], axis=1).astype(jnp.float32)                                     # (32, 8)

    kernel = functools.partial(_mlp_kernel, chunk=chunk, num_chunks=num_chunks)

    fn = pl.pallas_call(
        kernel,
        out_shape=jax.ShapeDtypeStruct((1, Bp), jnp.float32),
        grid_spec=pltpu.PrefetchScalarGridSpec(
            num_scalar_prefetch=0,
            grid=grid,
            in_specs=[
                pl.BlockSpec((NC, tile), lambda i: (0, i)),              # x, batch on lanes
                pl.BlockSpec((3, HIDDEN, HIDDEN), lambda i: (0, 0, 0)),  # hidden W slab
                pl.BlockSpec((HIDDEN, 8), lambda i: (0, 0)),             # rank-1 param slab
            ],
            out_specs=pl.BlockSpec((1, tile), lambda i: (0, i)),         # lane-dense out
        ),
        compiler_params=pltpu.CompilerParams(
            dimension_semantics=("parallel",)),
    )
    out_t = fn(xt, wh, sp)                 # (1, Bp); padded lanes are garbage
    return out_t[:, :B].T                  # back to caller layout (B, 1)


def init_params(key):
    """Deterministic init mimicking PyTorch nn.Linear default U(-1/sqrt(fan_in), +)."""
    dims = [(NC, HIDDEN), (HIDDEN, HIDDEN), (HIDDEN, HIDDEN),
            (HIDDEN, HIDDEN), (HIDDEN, 1)]
    params = []
    for (fan_in, fan_out) in dims:
        key, kw, kb = jax.random.split(key, 3)
        bound = 1.0 / jnp.sqrt(float(fan_in))
        w = jax.random.uniform(kw, (fan_in, fan_out), jnp.float32, -bound, bound)
        b = jax.random.uniform(kb, (1, fan_out), jnp.float32, -bound, bound)
        params.append((w, b))
    return params


def _reference_forward(x, params):
    h = x
    for (w, b) in params:
        z = h @ w + b
        h = jnp.where(z >= 0, z, NEG_SLOPE * z)
    return h


if __name__ == "__main__":
    key = jax.random.PRNGKey(0)
    key, kx1, kx2 = jax.random.split(key, 3)
    params = init_params(key)

    # Case 1: small batch -> exercises lane padding + the v7x two-tile split,
    # with the default bf16-MXU-operand path.
    B1 = 300
    x1 = jax.random.normal(kx1, (B1, NC), jnp.float32)
    ref1 = _reference_forward(x1, params)
    out1 = jax.block_until_ready(discriminator_forward(x1, params))
    assert out1.shape == (B1, NC)
    # bf16 operands on the hidden 32x32 matmuls -> loose tolerance.
    assert jnp.allclose(out1, ref1, atol=5e-2, rtol=5e-2)

    # Case 2: larger batch -> exercises the multi-chunk inner loop (tile split
    # across 512-lane chunks), f32-operand MXU path for a tighter check.
    B2 = 2048
    x2 = jax.random.normal(kx2, (B2, NC), jnp.float32)
    ref2 = _reference_forward(x2, params)
    out2 = jax.block_until_ready(
        discriminator_forward(x2, params, use_bf16_matmul=False))
    assert out2.shape == (B2, NC)
    # Tolerance covers default-precision (bf16-pass) differences between the
    # XLA reference dot and the Mosaic MXU path.
    assert jnp.allclose(out2, ref2, atol=1e-2, rtol=1e-2)

    print("KERNEL_OK")
</pallas_src>

<mosaic_0001>
module attributes {stable_mosaic.version = 11 : i64} {
  func.func @_mlp_kernel(%arg0: i32, %arg1: memref<1x256xf32, #tpu.memory_space<vmem>>, %arg2: memref<3x32x32xbf16, #tpu.memory_space<vmem>>, %arg3: memref<32x8xf32, #tpu.memory_space<vmem>>, %arg4: memref<1x256xf32, #tpu.memory_space<vmem>>) attributes {dimension_semantics = [#tpu.dimension_semantics<parallel>], iteration_bounds = array<i64: 2>, scalar_prefetch = 0 : i64, scratch_operands = 0 : i64, tpu.core_type = #tpu.core_type<tc>, window_params = [{transform_indices = @transform_0, window_bounds = array<i64: 1, 256>}, {pipeline_mode = #tpu.pipeline_mode<synchronous>, transform_indices = @transform_1, window_bounds = array<i64: 3, 32, 32>}, {pipeline_mode = #tpu.pipeline_mode<synchronous>, transform_indices = @transform_2, window_bounds = array<i64: 32, 8>}, {transform_indices = @transform_3, window_bounds = array<i64: 1, 256>}]} {
    %c0 = arith.constant 0 : index
    %c0_0 = arith.constant 0 : index
    %c0_1 = arith.constant 0 : index
    %0 = vector.load %arg2[%c0, %c0_0, %c0_1] : memref<3x32x32xbf16, #tpu.memory_space<vmem>>, vector<1x32x32xbf16>
    %1 = vector.shape_cast %0 : vector<1x32x32xbf16> to vector<32x32xbf16>
    %c1 = arith.constant 1 : index
    %c0_2 = arith.constant 0 : index
    %c0_3 = arith.constant 0 : index
    %2 = vector.load %arg2[%c1, %c0_2, %c0_3] : memref<3x32x32xbf16, #tpu.memory_space<vmem>>, vector<1x32x32xbf16>
    %3 = vector.shape_cast %2 : vector<1x32x32xbf16> to vector<32x32xbf16>
    %c2 = arith.constant 2 : index
    %c0_4 = arith.constant 0 : index
    %c0_5 = arith.constant 0 : index
    %4 = vector.load %arg2[%c2, %c0_4, %c0_5] : memref<3x32x32xbf16, #tpu.memory_space<vmem>>, vector<1x32x32xbf16>
    %5 = vector.shape_cast %4 : vector<1x32x32xbf16> to vector<32x32xbf16>
    %c0_6 = arith.constant 0 : index
    %c0_7 = arith.constant 0 : index
    %6 = vector.load %arg3[%c0_6, %c0_7] : memref<32x8xf32, #tpu.memory_space<vmem>>, vector<32x1xf32>
    %7 = vector.shape_cast %6 : vector<32x1xf32> to vector<32x1xf32>
    %8 = vector.broadcast %7 : vector<32x1xf32> to vector<32x256xf32>
    %c0_8 = arith.constant 0 : index
    %c1_9 = arith.constant 1 : index
    %9 = vector.load %arg3[%c0_8, %c1_9] : memref<32x8xf32, #tpu.memory_space<vmem>>, vector<32x1xf32>
    %10 = vector.shape_cast %9 : vector<32x1xf32> to vector<32x1xf32>
    %11 = vector.broadcast %10 : vector<32x1xf32> to vector<32x256xf32>
    %c0_10 = arith.constant 0 : index
    %c2_11 = arith.constant 2 : index
    %12 = vector.load %arg3[%c0_10, %c2_11] : memref<32x8xf32, #tpu.memory_space<vmem>>, vector<32x1xf32>
    %13 = vector.shape_cast %12 : vector<32x1xf32> to vector<32x1xf32>
    %14 = vector.broadcast %13 : vector<32x1xf32> to vector<32x256xf32>
    %c0_12 = arith.constant 0 : index
    %c3 = arith.constant 3 : index
    %15 = vector.load %arg3[%c0_12, %c3] : memref<32x8xf32, #tpu.memory_space<vmem>>, vector<32x1xf32>
    %16 = vector.shape_cast %15 : vector<32x1xf32> to vector<32x1xf32>
    %17 = vector.broadcast %16 : vector<32x1xf32> to vector<32x256xf32>
    %c0_13 = arith.constant 0 : index
    %c4 = arith.constant 4 : index
    %18 = vector.load %arg3[%c0_13, %c4] : memref<32x8xf32, #tpu.memory_space<vmem>>, vector<32x1xf32>
    %19 = vector.shape_cast %18 : vector<32x1xf32> to vector<32x1xf32>
    %20 = vector.broadcast %19 : vector<32x1xf32> to vector<32x256xf32>
    %c0_14 = arith.constant 0 : index
    %c5 = arith.constant 5 : index
    %21 = vector.load %arg3[%c0_14, %c5] : memref<32x8xf32, #tpu.memory_space<vmem>>, vector<32x1xf32>
    %22 = vector.shape_cast %21 : vector<32x1xf32> to vector<32x1xf32>
    %23 = vector.broadcast %22 : vector<32x1xf32> to vector<32x256xf32>
    %c0_15 = arith.constant 0 : index
    %c6 = arith.constant 6 : index
    %24 = vector.load %arg3[%c0_15, %c6] : memref<32x8xf32, #tpu.memory_space<vmem>>, vector<1x1xf32>
    %25 = vector.shape_cast %24 : vector<1x1xf32> to vector<1x1xf32>
    %26 = vector.broadcast %25 : vector<1x1xf32> to vector<1x256xf32>
    %c0_i32 = arith.constant 0 : i32
    %c256_i32 = arith.constant 256 : i32
    %27 = arith.muli %c0_i32, %c256_i32 : i32
    %28 = tpu.assume_multiple %27, 128 : i32
    %c0_16 = arith.constant 0 : index
    %29 = arith.index_cast %28 : i32 to index
    %30 = vector.load %arg1[%c0_16, %29] : memref<1x256xf32, #tpu.memory_space<vmem>>, vector<1x256xf32>
    %31 = vector.broadcast %30 : vector<1x256xf32> to vector<32x256xf32>
    %32 = arith.mulf %8, %31 : vector<32x256xf32>
    %33 = arith.addf %32, %14 : vector<32x256xf32>
    %cst = arith.constant 2.000000e-01 : f32
    %34 = vector.broadcast %cst : f32 to vector<32x256xf32>
    %35 = arith.mulf %34, %33 : vector<32x256xf32>
    %36 = arith.maximumf %33, %35 : vector<32x256xf32>
    %37 = arith.truncf %36 : vector<32x256xf32> to vector<32x256xbf16>
    %cst_17 = arith.constant dense<0.000000e+00> : vector<32x256xf32>
    %38 = tpu.matmul %1, %37, %cst_17 {dimension_numbers = #tpu.dot_dimension_numbers<[1], [0], [0], [1], [0, 0, 1, 1], [], []>} : vector<32x32xbf16>, vector<32x256xbf16>, vector<32x256xf32> -> vector<32x256xf32>
    %39 = arith.addf %38, %17 : vector<32x256xf32>
    %cst_18 = arith.constant 2.000000e-01 : f32
    %40 = vector.broadcast %cst_18 : f32 to vector<32x256xf32>
    %41 = arith.mulf %40, %39 : vector<32x256xf32>
    %42 = arith.maximumf %39, %41 : vector<32x256xf32>
    %43 = arith.truncf %42 : vector<32x256xf32> to vector<32x256xbf16>
    %cst_19 = arith.constant dense<0.000000e+00> : vector<32x256xf32>
    %44 = tpu.matmul %3, %43, %cst_19 {dimension_numbers = #tpu.dot_dimension_numbers<[1], [0], [0], [1], [0, 0, 1, 1], [], []>} : vector<32x32xbf16>, vector<32x256xbf16>, vector<32x256xf32> -> vector<32x256xf32>
    %45 = arith.addf %44, %20 : vector<32x256xf32>
    %cst_20 = arith.constant 2.000000e-01 : f32
    %46 = vector.broadcast %cst_20 : f32 to vector<32x256xf32>
    %47 = arith.mulf %46, %45 : vector<32x256xf32>
    %48 = arith.maximumf %45, %47 : vector<32x256xf32>
    %49 = arith.truncf %48 : vector<32x256xf32> to vector<32x256xbf16>
    %cst_21 = arith.constant dense<0.000000e+00> : vector<32x256xf32>
    %50 = tpu.matmul %5, %49, %cst_21 {dimension_numbers = #tpu.dot_dimension_numbers<[1], [0], [0], [1], [0, 0, 1, 1], [], []>} : vector<32x32xbf16>, vector<32x256xbf16>, vector<32x256xf32> -> vector<32x256xf32>
    %51 = arith.addf %50, %23 : vector<32x256xf32>
    %cst_22 = arith.constant 2.000000e-01 : f32
    %52 = vector.broadcast %cst_22 : f32 to vector<32x256xf32>
    %53 = arith.mulf %52, %51 : vector<32x256xf32>
    %54 = arith.maximumf %51, %53 : vector<32x256xf32>
    %55 = arith.mulf %11, %54 : vector<32x256xf32>
    %cst_23 = arith.constant dense<0.000000e+00> : vector<256xf32>
    %56 = vector.multi_reduction <add>, %55, %cst_23 [0] : vector<32x256xf32> to vector<256xf32>
    %57 = vector.shape_cast %56 : vector<256xf32> to vector<1x256xf32>
    %58 = arith.addf %57, %26 : vector<1x256xf32>
    %cst_24 = arith.constant 2.000000e-01 : f32
    %59 = vector.broadcast %cst_24 : f32 to vector<1x256xf32>
    %60 = arith.mulf %59, %58 : vector<1x256xf32>
    %61 = arith.maximumf %58, %60 : vector<1x256xf32>
    %c0_25 = arith.constant 0 : index
    %62 = arith.index_cast %28 : i32 to index
    %63 = vector.load %arg4[%c0_25, %62] : memref<1x256xf32, #tpu.memory_space<vmem>>, vector<1x256xf32>
    tpu.vector_store %arg4[%c0_25, %62], %61 {strides = array<i32>} : memref<1x256xf32, #tpu.memory_space<vmem>>, vector<1x256xf32>,
    %c1_i32 = arith.constant 1 : i32
    return
  }
  func.func @transform_0(%arg0: i32) -> (i32, i32) {
    %c0_i32 = arith.constant 0 : i32
    %c0_i32_0 = arith.constant 0 : i32
    return %c0_i32, %arg0 : i32, i32
  }
  func.func @transform_1(%arg0: i32) -> (i32, i32, i32) {
    %c0_i32 = arith.constant 0 : i32
    %c0_i32_0 = arith.constant 0 : i32
    %c0_i32_1 = arith.constant 0 : i32
    %c0_i32_2 = arith.constant 0 : i32
    return %c0_i32, %c0_i32_0, %c0_i32_1 : i32, i32, i32
  }
  func.func @transform_2(%arg0: i32) -> (i32, i32) {
    %c0_i32 = arith.constant 0 : i32
    %c0_i32_0 = arith.constant 0 : i32
    %c0_i32_1 = arith.constant 0 : i32
    return %c0_i32, %c0_i32_0 : i32, i32
  }
  func.func @transform_3(%arg0: i32) -> (i32, i32) {
    %c0_i32 = arith.constant 0 : i32
    %c0_i32_0 = arith.constant 0 : i32
    return %c0_i32, %arg0 : i32, i32
  }
}

</mosaic_0001>

<llo_original>
// kernel: tpu_custom_call.1
$region0: #{tpu_custom_call.1}
  #allocation0 [shape = 'u32[]', space=smem, size = 0x4, offset = 0x4, fixed_abs, tag = 'smem constant byte address 0x4 - core index']
  #allocation1 [shape = 'u32[72,128]{1,0:T(1,128)}', space=vmem, size = 0x9000, scoped, tag = 'internal scratch']
  %s0 = inlined_call_operand.vmem [shape: f32[1,512], index: 0, kind: input, shape index: {}]
  %s1 = inlined_call_operand.hbm [shape: bf16[3,32,32], index: 1, kind: input, shape index: {}]
  %s2 = inlined_call_operand.vmem [shape: f32[32,8], index: 2, kind: input, shape index: {}]
  %s3 = inlined_call_operand.hbm [shape: f32[1,512], index: 3, kind: output, shape index: {}]
  %s4 = sld [smem:[#allocation0]]
  $region49: #{tpu_custom_call.1} parent=0
    _
  %s6 = ssub.s32 1, %s4
  %s7 = scalar_select 0, %s6, %s4
  $region1: #{tpu_custom_call.1} parent=0
    #allocation2 [shape = 'u8[24576]{0}', space=vmem, size = 0x6000, scoped, tag = 'input window, operand 1, single buffered']
    #allocation3 [shape = 's32[2]{0}', space=sflag, size = 0x8, scoped, tag = 'scoped memory for tpu_custom_call.1']
    #allocation4 [shape = 's32[2]{0}', space=sflag, size = 0x8, scoped, tag = 'scoped memory for tpu_custom_call.1']
    #allocation5 [shape = 'u8[2048]{0}', space=vmem, size = 0x800, scoped, tag = 'output window, operand 0']
    %8 = vsyncpa [#allocation3], 0
    %9 = vsyncpa [#allocation4], 0
    %s10 = scalar_lea.sflag [#allocation4], 1
    %11 = vsyncpa %s10, 0
    loop: start=0, step=1, limit=4
    $region2: #{tpu_custom_call.1} parent=1 // loop_pre_header
      _
    $region3: #{tpu_custom_call.1} parent=1 // loop_header
      %s13 = sphi 0, %s17
      %p14 = scmp.ge.s32.totalorder %s13, 4
      %s23 = sphi 0, %s25
      %s26 = sphi 0, %s23
      %s27 = sphi 0, %s26
      %s43 = sphi 0, %s27
      %s47 = sphi 0, %s47
      %s49 = sphi 0, %s47
      %s50 = sphi 0, %s49
      %s64 = sphi 0, %s50
      %s68 = sphi 0, %s68
      %s70 = sphi 0, %s68
      %s71 = sphi 0, %s70
      %s85 = sphi 0, %s71
      %s91 = sphi 0, %s93
      %s94 = sphi 0, %s91
      %s95 = sphi 0, %s94
      %s111 = sphi 0, %s95
    $region4: #{tpu_custom_call.1} parent=1 // loop_header_branch
      %16 = sbr.rel (%p14) target = $region8
    $region5: #{tpu_custom_call.1} parent=1 // loop_body
      %s18 = ssub.s32 %s13, 1
      %s19 = ssub.s32 %s13, 2
      %s20 = sadd.s32 %s13, 1
      %s21 = ssub.s32 %s13, %s20
      %p22 = scmp.eq.s32.totalorder %s21, 0
      %s24 = sadd.s32 %s23, 1
      %s25 = scalar_select %p22, %s23, %s24
      %p28 = pneg %p22
      %p29 = scmp.eq.s32.totalorder %s13, 1
      %p30 = por %p28, %p29
      %p31 = scmp.ne.s32.totalorder %s23, %s26
      %p32 = scmp.eq.s32.totalorder %s13, 0
      %p33 = por %p31, %p32
      %p34 = scmp.ne.s32.totalorder %s23, %s26
      %p35 = scmp.eq.s32.totalorder %s18, 1
      %p36 = por %p34, %p35
      %p37 = scmp.ne.s32.totalorder %s26, %s27
      %p38 = scmp.eq.s32.totalorder %s18, 0
      %p39 = por %p37, %p38
      %p40 = scmp.ne.s32.totalorder %s26, %s27
      %p41 = scmp.eq.s32.totalorder %s19, 1
      %p42 = por %p40, %p41
      %p44 = scmp.ne.s32.totalorder %s27, %s43
      %p45 = scmp.eq.s32.totalorder %s19, 0
      %p46 = por %p44, %p45
      %s48 = sadd.s32 %s47, 1
      %p51 = scmp.eq.s32.totalorder %s13, 1
      %p52 = scmp.ne.s32.totalorder %s47, %s49
      %p53 = scmp.eq.s32.totalorder %s13, 0
      %p54 = por %p52, %p53
      %p55 = scmp.ne.s32.totalorder %s47, %s49
      %p56 = scmp.eq.s32.totalorder %s18, 1
      %p57 = por %p55, %p56
      %p58 = scmp.ne.s32.totalorder %s49, %s50
      %p59 = scmp.eq.s32.totalorder %s18, 0
      %p60 = por %p58, %p59
      %p61 = scmp.ne.s32.totalorder %s49, %s50
      %p62 = scmp.eq.s32.totalorder %s19, 1
      %p63 = por %p61, %p62
      %p65 = scmp.ne.s32.totalorder %s50, %s64
      %p66 = scmp.eq.s32.totalorder %s19, 0
      %p67 = por %p65, %p66
      %s69 = sadd.s32 %s68, 1
      %p72 = scmp.eq.s32.totalorder %s13, 1
      %p73 = scmp.ne.s32.totalorder %s68, %s70
      %p74 = scmp.eq.s32.totalorder %s13, 0
      %p75 = por %p73, %p74
      %p76 = scmp.ne.s32.totalorder %s68, %s70
      %p77 = scmp.eq.s32.totalorder %s18, 1
      %p78 = por %p76, %p77
      %p79 = scmp.ne.s32.totalorder %s70, %s71
      %p80 = scmp.eq.s32.totalorder %s18, 0
      %p81 = por %p79, %p80
      %p82 = scmp.ne.s32.totalorder %s70, %s71
      %p83 = scmp.eq.s32.totalorder %s19, 1
      %p84 = por %p82, %p83
      %p86 = scmp.ne.s32.totalorder %s71, %s85
      %p87 = scmp.eq.s32.totalorder %s19, 0
      %p88 = por %p86, %p87
      %s89 = ssub.s32 %s13, %s20
      %p90 = scmp.eq.s32.totalorder %s89, 0
      %s92 = sadd.s32 %s91, 1
      %s93 = scalar_select %p90, %s91, %s92
      %p96 = pneg %p90
      %p97 = scmp.eq.s32.totalorder %s13, 1
      %p98 = por %p96, %p97
      %p99 = scmp.ne.s32.totalorder %s91, %s94
      %p100 = scmp.eq.s32.totalorder %s13, 0
      %p101 = por %p99, %p100
      %p102 = scmp.ne.s32.totalorder %s91, %s94
      %p103 = scmp.eq.s32.totalorder %s18, 1
      %p104 = por %p102, %p103
      %p105 = scmp.ne.s32.totalorder %s94, %s95
      %p106 = scmp.eq.s32.totalorder %s18, 0
      %p107 = por %p105, %p106
      %p108 = scmp.ne.s32.totalorder %s94, %s95
      %p109 = scmp.eq.s32.totalorder %s19, 1
      %p110 = por %p108, %p109
      %p112 = scmp.ne.s32.totalorder %s95, %s111
      %p113 = scmp.eq.s32.totalorder %s19, 0
      %p114 = por %p112, %p113
      %p115 = scmp.le.s32.totalorder 1, %s13
      %p116 = scmp.lt.s32.totalorder %s13, 3
      %p117 = pnand %p115, %p116
      %p118 = pneg %p117
      // Predicated region
      $region9: #{tpu_custom_call.1} parent=5 // pred_check
        _
      $region10: #{tpu_custom_call.1} parent=5 // pred_check_branch
        %120 = sbr.rel (%p117) target = $region12
      $region11: #{tpu_custom_call.1} parent=5 // pred_region
        %s121 = ssub.s32 %s13, 1
        // Predicated region
        $region13: #{tpu_custom_call.1} parent=11 // pred_check
          %p122 = pneg %p60
        $region14: #{tpu_custom_call.1} parent=11 // pred_check_branch
          %124 = sbr.rel (%p122) target = $region16
        $region15: #{tpu_custom_call.1} parent=11 // pred_region
          %126 = vsyncadd [#allocation3], 0
          %s127 = sshll.u32 %s1, 4
          %s128 = int_to_ptr.hbm [resolvable:$true] %s127
          %s129 = sshll.u32 [#allocation2], 4
          %s130 = int_to_ptr.vmem [resolvable:$true] %s129
          %135 = dma.hbm_to_vmem [thread:$0]  %s128, 768, %s130, [#allocation3], 64, 64, 4
        $region16: #{tpu_custom_call.1} parent=11 // pred_fallthru
          _
        // Predicated region
        $region17: #{tpu_custom_call.1} parent=11 // pred_check
          %p136 = pneg %p81
        $region18: #{tpu_custom_call.1} parent=11 // pred_check_branch
          %138 = sbr.rel (%p136) target = $region20
        $region19: #{tpu_custom_call.1} parent=11 // pred_region
          _
        $region20: #{tpu_custom_call.1} parent=11 // pred_fallthru
          _
      $region12: #{tpu_custom_call.1} parent=5 // pred_fallthru
        _
      %p139 = scmp.lt.s32.totalorder %s13, 2
      // Predicated region
      $region21: #{tpu_custom_call.1} parent=5 // pred_check
        %p140 = pneg %p139
      $region22: #{tpu_custom_call.1} parent=5 // pred_check_branch
        %142 = sbr.rel (%p140) target = $region24
      $region23: #{tpu_custom_call.1} parent=5 // pred_region
        // Predicated region
        $region25: #{tpu_custom_call.1} parent=23 // pred_check
          %p143 = pneg %p33
        $region26: #{tpu_custom_call.1} parent=23 // pred_check_branch
          %145 = sbr.rel (%p143) target = $region28
        $region27: #{tpu_custom_call.1} parent=23 // pred_region
          %s146 = smul.u32 2, %s13
          %p147 = scmp.lt.s32.totalorder %s146, 3
          %s148 = scalar_select %p147, %s146, 3
          %s149 = scalar_lea.vmem %s0, %s148
          %s150 = smul.u32 2, %s13
        $region28: #{tpu_custom_call.1} parent=23 // pred_fallthru
          _
      $region24: #{tpu_custom_call.1} parent=5 // pred_fallthru
        _
      %p151 = scmp.le.s32.totalorder 1, %s13
      %p152 = scmp.lt.s32.totalorder %s13, 3
      %p153 = pnand %p151, %p152
      %p154 = pneg %p153
      // Predicated region
      $region29: #{tpu_custom_call.1} parent=5 // pred_check
        _
      $region30: #{tpu_custom_call.1} parent=5 // pred_check_branch
        %156 = sbr.rel (%p153) target = $region32
      $region31: #{tpu_custom_call.1} parent=5 // pred_region
        %s157 = ssub.s32 %s13, 1
        // Predicated region
        $region33: #{tpu_custom_call.1} parent=31 // pred_check
          %p158 = pneg %p60
        $region34: #{tpu_custom_call.1} parent=31 // pred_check_branch
          %160 = sbr.rel (%p158) target = $region36
        $region35: #{tpu_custom_call.1} parent=31 // pred_region
          %162 = dma.done [#allocation3], 768
        $region36: #{tpu_custom_call.1} parent=31 // pred_fallthru
          _
        %s163 = smul.u32 2, %s18
        %p164 = scmp.lt.s32.totalorder %s163, 3
        %s165 = scalar_select %p164, %s163, 3
        %s166 = scalar_lea.vmem %s0, %s165
        %p167 = pneg %p39
        %p168 = pneg %p36
        %p169 = pneg %p60
        %p170 = pneg %p57
        %p171 = pneg %p81
        %p172 = pneg %p78
        %p173 = pneg %p107
        %p174 = pneg %p104
        %s175 = sand.u32 %s94, 1
        %s176 = scalar_lea.sflag [#allocation4], %s175
        %s177 = sand.u32 %s94, 1
        %s178 = smul.addr %s177, 2
        %s179 = scalar_lea.vmem [#allocation5], %s178
        %s180 = smul.u32 2, %s18
        %p181 = scmp.lt.s32.totalorder %s180, 3
        %s182 = scalar_select %p181, %s180, 3
        %s183 = scalar_lea.vmem %s0, %s182
        %s184 = smul.u32 2, %s18
        %s185 = smul.u32 2, %s18
        %v187 = vld [vmem:[#allocation2] sm:$0xf]
        %v188 = vld [vmem:[#allocation2 + $0x4] sm:$0xf]
        %v189 = vld [vmem:[#allocation2 + $0x8] sm:$0xf]
        %v190 = vld [vmem:[#allocation2 + $0xc] sm:$0xf]
        %s191 = scalar_lea.vmem [#allocation2], 16
        %v192 = vld [vmem:[%s191] sm:$0xf]
        %v193 = vld [vmem:[%s191 + $0x4] sm:$0xf]
        %v194 = vld [vmem:[%s191 + $0x8] sm:$0xf]
        %v195 = vld [vmem:[%s191 + $0xc] sm:$0xf]
        %s196 = scalar_lea.vmem [#allocation2], 32
        %v197 = vld [vmem:[%s196] sm:$0xf]
        %v198 = vld [vmem:[%s196 + $0x4] sm:$0xf]
        %v199 = vld [vmem:[%s196 + $0x8] sm:$0xf]
        %v200 = vld [vmem:[%s196 + $0xc] sm:$0xf]
        %v201 = vld [vmem:[%s2] sm:$0xff]
        %v202 = vld [vmem:[%s2 + $0x8] sm:$0xff]
        %v203 = vld [vmem:[%s2 + $0x10] sm:$0xff]
        %v204 = vld [vmem:[%s2 + $0x18] sm:$0xff]
        %206 = vset.pattern.permute.xlu0 0
        %207 = vperm.xlu0 %206, %v201
        %v208 = vpop.permute.xlu0 %207
        %211 = vset.pattern.permute.xlu0 0
        %212 = vperm.xlu0 %211, %v202
        %v213 = vpop.permute.xlu0 %212
        %216 = vset.pattern.permute.xlu0 0
        %217 = vperm.xlu0 %216, %v203
        %v218 = vpop.permute.xlu0 %217
        %221 = vset.pattern.permute.xlu0 0
        %222 = vperm.xlu0 %221, %v204
        %v223 = vpop.permute.xlu0 %222
        %225 = vset.pattern.permute.xlu0 1
        %226 = vperm.xlu0 %225, %v201
        %v227 = vpop.permute.xlu0 %226
        %229 = vset.pattern.permute.xlu0 1
        %230 = vperm.xlu0 %229, %v202
        %v231 = vpop.permute.xlu0 %230
        %233 = vset.pattern.permute.xlu0 1
        %234 = vperm.xlu0 %233, %v203
        %v235 = vpop.permute.xlu0 %234
        %237 = vset.pattern.permute.xlu0 1
        %238 = vperm.xlu0 %237, %v204
        %v239 = vpop.permute.xlu0 %238
        %241 = vset.pattern.permute.xlu0 2
        %242 = vperm.xlu0 %241, %v201
        %v243 = vpop.permute.xlu0 %242
        %245 = vset.pattern.permute.xlu0 2
        %246 = vperm.xlu0 %245, %v202
        %v247 = vpop.permute.xlu0 %246
        %249 = vset.pattern.permute.xlu0 2
        %250 = vperm.xlu0 %249, %v203
        %v251 = vpop.permute.xlu0 %250
        %253 = vset.pattern.permute.xlu0 2
        %254 = vperm.xlu0 %253, %v204
        %v255 = vpop.permute.xlu0 %254
        %257 = vset.pattern.permute.xlu0 3
        %258 = vperm.xlu0 %257, %v201
        %v259 = vpop.permute.xlu0 %258
        %261 = vset.pattern.permute.xlu0 3
        %262 = vperm.xlu0 %261, %v202
        %v263 = vpop.permute.xlu0 %262
        %265 = vset.pattern.permute.xlu0 3
        %266 = vperm.xlu0 %265, %v203
        %v267 = vpop.permute.xlu0 %266
        %269 = vset.pattern.permute.xlu0 3
        %270 = vperm.xlu0 %269, %v204
        %v271 = vpop.permute.xlu0 %270
        %273 = vset.pattern.permute.xlu0 4
        %274 = vperm.xlu0 %273, %v201
        %v275 = vpop.permute.xlu0 %274
        %277 = vset.pattern.permute.xlu0 4
        %278 = vperm.xlu0 %277, %v202
        %v279 = vpop.permute.xlu0 %278
        %281 = vset.pattern.permute.xlu0 4
        %282 = vperm.xlu0 %281, %v203
        %v283 = vpop.permute.xlu0 %282
        %285 = vset.pattern.permute.xlu0 4
        %286 = vperm.xlu0 %285, %v204
        %v287 = vpop.permute.xlu0 %286
        %289 = vset.pattern.permute.xlu0 5
        %290 = vperm.xlu0 %289, %v201
        %v291 = vpop.permute.xlu0 %290
        %293 = vset.pattern.permute.xlu0 5
        %294 = vperm.xlu0 %293, %v202
        %v295 = vpop.permute.xlu0 %294
        %297 = vset.pattern.permute.xlu0 5
        %298 = vperm.xlu0 %297, %v203
        %v299 = vpop.permute.xlu0 %298
        %301 = vset.pattern.permute.xlu0 5
        %302 = vperm.xlu0 %301, %v204
        %v303 = vpop.permute.xlu0 %302
        %v305 = vld [vmem:[%s2] sm:$0x1]
        %307 = vset.pattern.permute.xlu0 6
        %308 = vperm.xlu0 %307, %v305
        %v309 = vpop.permute.xlu0 %308
        %v311 = vld [vmem:[%s183] sm:$0x3]
        %v313 = vperm.slane %v311, 0
        %v314 = vperm.slane %v311, 1
        %v317 = vmul.f32 %v208, %v313
        %v318 = vmul.f32 %v208, %v314
        %v319 = vmul.f32 %v213, %v313
        %v320 = vmul.f32 %v213, %v314
        %v321 = vmul.f32 %v218, %v313
        %v322 = vmul.f32 %v218, %v314
        %v323 = vmul.f32 %v223, %v313
        %v324 = vmul.f32 %v223, %v314
        %v325 = vadd.f32 %v317, %v243
        %v326 = vadd.f32 %v318, %v243
        %v327 = vadd.f32 %v319, %v247
        %v328 = vadd.f32 %v320, %v247
        %v329 = vadd.f32 %v321, %v251
        %v330 = vadd.f32 %v322, %v251
        %v331 = vadd.f32 %v323, %v255
        %v332 = vadd.f32 %v324, %v255
        %v333 = vmul.f32 %v325, 0.2
        %v334 = vmul.f32 %v326, 0.2
        %v335 = vmul.f32 %v327, 0.2
        %v336 = vmul.f32 %v328, 0.2
        %v337 = vmul.f32 %v329, 0.2
        %v338 = vmul.f32 %v330, 0.2
        %v339 = vmul.f32 %v331, 0.2
        %v340 = vmul.f32 %v332, 0.2
        %v341 = vmax.f32 %v325, %v333
        %v342 = vmax.f32 %v326, %v334
        %v343 = vmax.f32 %v327, %v335
        %v344 = vmax.f32 %v328, %v336
        %v345 = vmax.f32 %v329, %v337
        %v346 = vmax.f32 %v330, %v338
        %v347 = vmax.f32 %v331, %v339
        %v348 = vmax.f32 %v332, %v340
        %v349 = vpack.c.bf16 %v343, %v341
        %v350 = vpack.c.bf16 %v344, %v342
        %v351 = vpack.c.bf16 %v347, %v345
        %v352 = vpack.c.bf16 %v348, %v346
        %v357 = vunpack.c.l.b16 %v187
        %v358 = vunpack.c.l.b16 %v188
        %v359 = vunpack.c.l.b16 %v189
        %v360 = vunpack.c.l.b16 %v190
        %v361 = vpack.c.b16 %v358, %v357
        %v362 = vpack.c.b16 %v360, %v359
        %vm363 = vcmask 261120
        %v365 = vsel %vm363, %v361, 0
        %v368 = vsel %vm363, %v362, 0
        %370 = vmatpush.bf16.msra.mxu0 0
        %371 = vmatpush.bf16.msra.mxu0 0
        %372 = vmatpush.bf16.msra.mxu0 0
        %373 = vmatpush.bf16.msra.mxu0 0
        %374 = vmatpush.bf16.msra.mxu0 0
        %375 = vmatpush.bf16.msra.mxu0 0
        %376 = vmatpush.bf16.msra.mxu0 %v351
        %377 = vmatpush.bf16.msra.mxu0 %v349
        %378 = vmatmul.bf16.gmra.mxu0 %v365
        %v379 = vpop.f32.mrf.mxu0
        %v380 = vadd.f32 %v259, %v379
        %v381 = vpop.f32.mrf.mxu0
        %v382 = vadd.f32 %v263, %v381
        %383 = vmatmul.bf16.gmra.mxu0 %v368
        %v384 = vpop.f32.mrf.mxu0
        %v385 = vadd.f32 %v267, %v384
        %v386 = vpop.f32.mrf.mxu0
        %v387 = vadd.f32 %v271, %v386
        %388 = vdwg.mxu0
        %389 = vmatpush.bf16.msra.mxu0 0
        %390 = vmatpush.bf16.msra.mxu0 0
        %391 = vmatpush.bf16.msra.mxu0 0
        %392 = vmatpush.bf16.msra.mxu0 0
        %393 = vmatpush.bf16.msra.mxu0 0
        %394 = vmatpush.bf16.msra.mxu0 0
        %395 = vmatpush.bf16.msra.mxu0 %v352
        %396 = vmatpush.bf16.msra.mxu0 %v350
        %397 = vmatmul.bf16.gmra.mxu0 %v365
        %v398 = vpop.f32.mrf.mxu0
        %v399 = vadd.f32 %v259, %v398
        %v400 = vpop.f32.mrf.mxu0
        %v401 = vadd.f32 %v263, %v400
        %402 = vmatmul.bf16.gmra.mxu0 %v368
        %v403 = vpop.f32.mrf.mxu0
        %v404 = vadd.f32 %v267, %v403
        %v405 = vpop.f32.mrf.mxu0
        %v406 = vadd.f32 %v271, %v405
        %407 = vdwg.mxu0
        %v408 = vmul.f32 %v380, 0.2
        %v409 = vmul.f32 %v399, 0.2
        %v410 = vmul.f32 %v382, 0.2
        %v411 = vmul.f32 %v401, 0.2
        %v412 = vmul.f32 %v385, 0.2
        %v413 = vmul.f32 %v404, 0.2
        %v414 = vmul.f32 %v387, 0.2
        %v415 = vmul.f32 %v406, 0.2
        %v416 = vmax.f32 %v380, %v408
        %v417 = vmax.f32 %v399, %v409
        %v418 = vmax.f32 %v382, %v410
        %v419 = vmax.f32 %v401, %v411
        %v420 = vmax.f32 %v385, %v412
        %v421 = vmax.f32 %v404, %v413
        %v422 = vmax.f32 %v387, %v414
        %v423 = vmax.f32 %v406, %v415
        %v424 = vpack.c.bf16 %v418, %v416
        %v425 = vpack.c.bf16 %v419, %v417
        %v426 = vpack.c.bf16 %v422, %v420
        %v427 = vpack.c.bf16 %v423, %v421
        %v432 = vunpack.c.l.b16 %v192
        %v433 = vunpack.c.l.b16 %v193
        %v434 = vunpack.c.l.b16 %v194
        %v435 = vunpack.c.l.b16 %v195
        %v436 = vpack.c.b16 %v433, %v432
        %v437 = vpack.c.b16 %v435, %v434
        %v439 = vsel %vm363, %v436, 0
        %v442 = vsel %vm363, %v437, 0
        %444 = vmatpush.bf16.msra.mxu0 0
        %445 = vmatpush.bf16.msra.mxu0 0
        %446 = vmatpush.bf16.msra.mxu0 0
        %447 = vmatpush.bf16.msra.mxu0 0
        %448 = vmatpush.bf16.msra.mxu0 0
        %449 = vmatpush.bf16.msra.mxu0 0
        %450 = vmatpush.bf16.msra.mxu0 %v426
        %451 = vmatpush.bf16.msra.mxu0 %v424
        %452 = vmatmul.bf16.gmra.mxu0 %v439
        %v453 = vpop.f32.mrf.mxu0
        %v454 = vadd.f32 %v275, %v453
        %v455 = vpop.f32.mrf.mxu0
        %v456 = vadd.f32 %v279, %v455
        %457 = vmatmul.bf16.gmra.mxu0 %v442
        %v458 = vpop.f32.mrf.mxu0
        %v459 = vadd.f32 %v283, %v458
        %v460 = vpop.f32.mrf.mxu0
        %v461 = vadd.f32 %v287, %v460
        %462 = vdwg.mxu0
        %463 = vmatpush.bf16.msra.mxu0 0
        %464 = vmatpush.bf16.msra.mxu0 0
        %465 = vmatpush.bf16.msra.mxu0 0
        %466 = vmatpush.bf16.msra.mxu0 0
        %467 = vmatpush.bf16.msra.mxu0 0
        %468 = vmatpush.bf16.msra.mxu0 0
        %469 = vmatpush.bf16.msra.mxu0 %v427
        %470 = vmatpush.bf16.msra.mxu0 %v425
        %471 = vmatmul.bf16.gmra.mxu0 %v439
        %v472 = vpop.f32.mrf.mxu0
        %v473 = vadd.f32 %v275, %v472
        %v474 = vpop.f32.mrf.mxu0
        %v475 = vadd.f32 %v279, %v474
        %476 = vmatmul.bf16.gmra.mxu0 %v442
        %v477 = vpop.f32.mrf.mxu0
        %v478 = vadd.f32 %v283, %v477
        %v479 = vpop.f32.mrf.mxu0
        %v480 = vadd.f32 %v287, %v479
        %481 = vdwg.mxu0
        %v482 = vmul.f32 %v454, 0.2
        %v483 = vmul.f32 %v473, 0.2
        %v484 = vmul.f32 %v456, 0.2
        %v485 = vmul.f32 %v475, 0.2
        %v486 = vmul.f32 %v459, 0.2
        %v487 = vmul.f32 %v478, 0.2
        %v488 = vmul.f32 %v461, 0.2
        %v489 = vmul.f32 %v480, 0.2
        %v490 = vmax.f32 %v454, %v482
        %v491 = vmax.f32 %v473, %v483
        %v492 = vmax.f32 %v456, %v484
        %v493 = vmax.f32 %v475, %v485
        %v494 = vmax.f32 %v459, %v486
        %v495 = vmax.f32 %v478, %v487
        %v496 = vmax.f32 %v461, %v488
        %v497 = vmax.f32 %v480, %v489
        %v498 = vpack.c.bf16 %v492, %v490
        %v499 = vpack.c.bf16 %v493, %v491
        %v500 = vpack.c.bf16 %v496, %v494
        %v501 = vpack.c.bf16 %v497, %v495
        %v506 = vunpack.c.l.b16 %v197
        %v507 = vunpack.c.l.b16 %v198
        %v508 = vunpack.c.l.b16 %v199
        %v509 = vunpack.c.l.b16 %v200
        %v510 = vpack.c.b16 %v507, %v506
        %v511 = vpack.c.b16 %v509, %v508
        %v513 = vsel %vm363, %v510, 0
        %v516 = vsel %vm363, %v511, 0
        %518 = vmatpush.bf16.msra.mxu0 0
        %519 = vmatpush.bf16.msra.mxu0 0
        %520 = vmatpush.bf16.msra.mxu0 0
        %521 = vmatpush.bf16.msra.mxu0 0
        %522 = vmatpush.bf16.msra.mxu0 0
        %523 = vmatpush.bf16.msra.mxu0 0
        %524 = vmatpush.bf16.msra.mxu0 %v500
        %525 = vmatpush.bf16.msra.mxu0 %v498
        %526 = vmatmul.bf16.gmra.mxu0 %v513
        %v527 = vpop.f32.mrf.mxu0
        %v528 = vadd.f32 %v291, %v527
        %v529 = vpop.f32.mrf.mxu0
        %v530 = vadd.f32 %v295, %v529
        %531 = vmatmul.bf16.gmra.mxu0 %v516
        %v532 = vpop.f32.mrf.mxu0
        %v533 = vadd.f32 %v299, %v532
        %v534 = vpop.f32.mrf.mxu0
        %v535 = vadd.f32 %v303, %v534
        %536 = vdwg.mxu0
        %537 = vmatpush.bf16.msra.mxu0 0
        %538 = vmatpush.bf16.msra.mxu0 0
        %539 = vmatpush.bf16.msra.mxu0 0
        %540 = vmatpush.bf16.msra.mxu0 0
        %541 = vmatpush.bf16.msra.mxu0 0
        %542 = vmatpush.bf16.msra.mxu0 0
        %543 = vmatpush.bf16.msra.mxu0 %v501
        %544 = vmatpush.bf16.msra.mxu0 %v499
        %545 = vmatmul.bf16.gmra.mxu0 %v513
        %v546 = vpop.f32.mrf.mxu0
        %v547 = vadd.f32 %v291, %v546
        %v548 = vpop.f32.mrf.mxu0
        %v549 = vadd.f32 %v295, %v548
        %550 = vmatmul.bf16.gmra.mxu0 %v516
        %v551 = vpop.f32.mrf.mxu0
        %v552 = vadd.f32 %v299, %v551
        %v553 = vpop.f32.mrf.mxu0
        %v554 = vadd.f32 %v303, %v553
        %555 = vdwg.mxu0
        %v556 = vmul.f32 %v528, 0.2
        %v557 = vmul.f32 %v547, 0.2
        %v558 = vmul.f32 %v530, 0.2
        %v559 = vmul.f32 %v549, 0.2
        %v560 = vmul.f32 %v533, 0.2
        %v561 = vmul.f32 %v552, 0.2
        %v562 = vmul.f32 %v535, 0.2
        %v563 = vmul.f32 %v554, 0.2
        %v564 = vmax.f32 %v528, %v556
        %v565 = vmax.f32 %v547, %v557
        %v566 = vmax.f32 %v530, %v558
        %v567 = vmax.f32 %v549, %v559
        %v568 = vmax.f32 %v533, %v560
        %v569 = vmax.f32 %v552, %v561
        %v570 = vmax.f32 %v535, %v562
        %v571 = vmax.f32 %v554, %v563
        %v572 = vmul.f32 %v227, %v564
        %v573 = vmul.f32 %v227, %v565
        %v574 = vmul.f32 %v231, %v566
        %v575 = vmul.f32 %v231, %v567
        %v576 = vmul.f32 %v235, %v568
        %v577 = vmul.f32 %v235, %v569
        %v578 = vmul.f32 %v239, %v570
        %v579 = vmul.f32 %v239, %v571
        %v580 = vadd.f32 %v572, %v574
        %v581 = vadd.f32 %v580, %v576
        %v582 = vadd.f32 %v581, %v578
        %v583 = vrot.slane %v582, 4
        %v584 = vadd.f32 %v582, %v583
        %v585 = vrot.slane %v584, 2
        %v586 = vadd.f32 %v584, %v585
        %v587 = vrot.slane %v586, 1
        %v588 = vadd.f32 %v586, %v587
        %v589 = vadd.f32 %v573, %v575
        %v590 = vadd.f32 %v589, %v577
        %v591 = vadd.f32 %v590, %v579
        %v592 = vrot.slane %v591, 4
        %v593 = vadd.f32 %v591, %v592
        %v594 = vrot.slane %v593, 2
        %v595 = vadd.f32 %v593, %v594
        %v596 = vrot.slane %v595, 1
        %v597 = vadd.f32 %v595, %v596
        %v598 = vadd.f32 %v588, %v309
        %v599 = vadd.f32 %v597, %v309
        %v600 = vmul.f32 %v598, 0.2
        %v601 = vmul.f32 %v599, 0.2
        %v602 = vmax.f32 %v598, %v600
        %v603 = vmax.f32 %v599, %v601
        %v606 = vrot.slane %v603, 7
        %vm607 = vcmask 1040384
        %v608 = vsel %vm607, %v602, %v606
        %v610 = vlaneseq
        %vm611 = vcmp.ge.s32.totalorder %v610, 0
        %vm612 = vcmp.lt.s32.totalorder %v610, 256
        %vm613 = vmand %vm611, %vm612
        %614 = vst.msk [vmem:[%s179] sm:$0x3] %vm613, %v608
        %s615 = sand.u32 %s94, 1
        %s616 = scalar_lea.sflag [#allocation4], %s615
        %s617 = sand.u32 %s94, 1
        %s618 = smul.addr %s617, 2
        %s619 = scalar_lea.vmem [#allocation5], %s618
        // Predicated region
        $region37: #{tpu_custom_call.1} parent=31 // pred_check
          %p620 = pneg %p104
        $region38: #{tpu_custom_call.1} parent=31 // pred_check_branch
          %622 = sbr.rel (%p620) target = $region40
        $region39: #{tpu_custom_call.1} parent=31 // pred_region
          %s623 = smul.u32 2, %s18
          %625 = vsyncadd %s616, 0
          %s626 = scalar_lea.hbm %s3, %s623
          %s628 = sshll.u32 %s619, 4
          %s629 = int_to_ptr.vmem [resolvable:$true] %s628
          %s630 = sshll.u32 %s626, 4
          %s631 = int_to_ptr.hbm [resolvable:$true] %s630
          %633 = dma.vmem_to_hbm [thread:$0]  %s629, 32, %s631, %s616
        $region40: #{tpu_custom_call.1} parent=31 // pred_fallthru
          _
      $region32: #{tpu_custom_call.1} parent=5 // pred_fallthru
        _
      %p634 = scmp.le.s32.totalorder 2, %s13
      // Predicated region
      $region41: #{tpu_custom_call.1} parent=5 // pred_check
        %p635 = pneg %p634
      $region42: #{tpu_custom_call.1} parent=5 // pred_check_branch
        %637 = sbr.rel (%p635) target = $region44
      $region43: #{tpu_custom_call.1} parent=5 // pred_region
        %s638 = ssub.s32 %s13, 2
        // Predicated region
        $region45: #{tpu_custom_call.1} parent=43 // pred_check
          %p639 = pneg %p110
        $region46: #{tpu_custom_call.1} parent=43 // pred_check_branch
          %641 = sbr.rel (%p639) target = $region48
        $region47: #{tpu_custom_call.1} parent=43 // pred_region
          %s642 = sand.u32 %s95, 1
          %s643 = scalar_lea.sflag [#allocation4], %s642
          %s644 = sand.u32 %s95, 1
          %s645 = smul.addr %s644, 2
          %s646 = scalar_lea.vmem [#allocation5], %s645
          %648 = dma.done %s643, 32
        $region48: #{tpu_custom_call.1} parent=43 // pred_fallthru
          _
      $region44: #{tpu_custom_call.1} parent=5 // pred_fallthru
        _
    $region6: #{tpu_custom_call.1} parent=1 // loop_footer
      %s17 = sadd.s32 1, %s13
    $region7: #{tpu_custom_call.1} parent=1 // loop_footer_branch
      %12 = sbr.rel target = $region3
    $region8: #{tpu_custom_call.1} parent=1 // loop_exit
      _
    %649 = vsyncpa [#allocation3], 1
    %s650 = scalar_lea.sflag [#allocation3], 1
    %651 = vsyncpa %s650, 1
    %652 = vsyncpa [#allocation4], 1
    %s653 = scalar_lea.sflag [#allocation4], 1
    %654 = vsyncpa %s653, 1

</llo_original>
